<compile_context>
chip_gen: v5e
topology: v5e:2x2
jax: 0.10.0
libtpu: 0.0.40
codegen_flags: <defaults>
</compile_context>

<pallas_src>
import jax
import jax.numpy as jnp
from jax.experimental import pallas as pl
from jax.experimental.pallas import tpu as pltpu


def _dgi_prop_kernel(adj_ref, xw_ref, b_ref, alpha_ref,
                     h1_ref, h2_ref, psum_ref,
                     acc_ref):
    """Propagate both GCN branches for one row tile, K-tiled contraction."""
    k = pl.program_id(1)

    @pl.when(k == 0)
    def _():
        acc_ref[...] = jnp.zeros_like(acc_ref)

    a = adj_ref[...]                                                   # (TM, TK) bf16
    acc_ref[0] += jnp.dot(a, xw_ref[0], preferred_element_type=jnp.float32)
    acc_ref[1] += jnp.dot(a, xw_ref[1], preferred_element_type=jnp.float32)

    @pl.when(k == pl.num_programs(1) - 1)
    def _():
        alpha = alpha_ref[0]                                           # PReLU slope (SMEM)
        b = b_ref[...]                                                 # (1, H) f32
        pre1 = acc_ref[0] + b
        pre2 = acc_ref[1] + b
        h1 = jnp.where(pre1 > 0, pre1, alpha * pre1)
        h2 = jnp.where(pre2 > 0, pre2, alpha * pre2)
        h1_ref[...] = h1.astype(h1_ref.dtype)
        h2_ref[...] = h2.astype(h2_ref.dtype)
        # per-row-tile partial sum of h1 (f32), reduced in the wrapper -> AvgReadout
        psum_ref[...] = jnp.sum(h1, axis=0, keepdims=True)[None, :, :]


def dgi_forward(seq1, seq2, adj, params, *, tile_m=256, tile_k=512):
    """seq1/seq2: (1, N, F), adj: (N, N). Returns (ret=(N,H), logits=(1,2N), q=(N,K))."""
    s1 = jnp.squeeze(seq1, axis=0)
    s2 = jnp.squeeze(seq2, axis=0)
    N, F = s1.shape
    H = params["w"].shape[1]

    TM = min(tile_m, N)
    TK = min(tile_k, N)
    assert N % TM == 0 and TM % 8 == 0, "row tile must divide N and be 8-aligned"
    assert N % TK == 0 and (TK % 128 == 0 or TK == N), "k tile must divide N, 128-aligned"
    n_row = N // TM
    n_k = N // TK

    # Feature transform (O(N*F*H), negligible) in plain XLA; leading-axis stack keeps
    # both branches lane-dense for the kernel.
    wb = params["w"].astype(jnp.bfloat16)
    xw = jnp.stack([
        jnp.dot(s1.astype(jnp.bfloat16), wb, preferred_element_type=jnp.float32),
        jnp.dot(s2.astype(jnp.bfloat16), wb, preferred_element_type=jnp.float32),
    ]).astype(jnp.bfloat16)                                            # (2, N, H)
    adjb = adj.astype(jnp.bfloat16)
    bias = params["b"].astype(jnp.float32).reshape(1, H)
    alpha = jnp.asarray(params["alpha"], jnp.float32).reshape(1)

    cost = pl.CostEstimate(
        flops=2 * 2 * N * N * H,                                       # both branches
        transcendentals=0,
        bytes_accessed=2 * N * N + 2 * 2 * N * H                       # bf16 adj + xw in
                       + 2 * 2 * N * H + 4 * n_row * H)                # bf16 h1/h2 + f32 psum out

    h1, h2, psum = pl.pallas_call(
        _dgi_prop_kernel,
        out_shape=(
            jax.ShapeDtypeStruct((N, H), jnp.bfloat16),                # ret = h_1
            jax.ShapeDtypeStruct((N, H), jnp.bfloat16),                # h_2 (for sc2)
            jax.ShapeDtypeStruct((n_row, 1, H), jnp.float32),          # partial row sums of h_1
        ),
        grid=(n_row, n_k),
        in_specs=[
            pl.BlockSpec((TM, TK), lambda i, k: (i, k)),               # adj tile (streamed)
            pl.BlockSpec((2, TK, H), lambda i, k: (0, k, 0)),          # [xw1; xw2] k-slab
            pl.BlockSpec((1, H), lambda i, k: (0, 0)),                 # GCN bias
            pl.BlockSpec(memory_space=pltpu.MemorySpace.SMEM),         # PReLU alpha
        ],
        out_specs=[
            pl.BlockSpec((TM, H), lambda i, k: (i, 0)),
            pl.BlockSpec((TM, H), lambda i, k: (i, 0)),
            pl.BlockSpec((1, 1, H), lambda i, k: (i, 0, 0)),
        ],
        scratch_shapes=[pltpu.VMEM((2, TM, H), jnp.float32)],          # f32 accumulators
        compiler_params=pltpu.CompilerParams(
            dimension_semantics=("parallel", "arbitrary")),            # rows parallel (v7x 2 TCs)
        cost_estimate=cost,
    )(adjb, xw, bias, alpha)

    # ---- cheap global tail (AvgReadout + bilinear discriminator + q) in the wrapper ----
    h1f = h1.astype(jnp.float32)
    h2f = h2.astype(jnp.float32)

    c = jax.nn.sigmoid(jnp.sum(psum[:, 0, :], axis=0, keepdims=True) / N)   # (1, H)
    v = c @ params["w_disc"].T                                              # (1, H)
    sc1 = h1f @ v.T + params["b_disc"]                                      # (N, 1)
    sc2 = h2f @ v.T + params["b_disc"]
    logits = jnp.concatenate([sc1, sc2], axis=0).reshape(1, 2 * N)          # [sc1 | sc2]

    clu = params["cluster"].astype(jnp.float32)                             # (K, H)
    diff = h1f[:, None, :] - clu[None, :, :]
    qn = 1.0 / (1.0 + jnp.sum(diff * diff, axis=2))
    # q = qn ** ((1 + 1) / 2) == qn  (identity, kept for fidelity with the reference)
    q = qn / jnp.sum(qn, axis=1, keepdims=True)

    return h1f, logits, q


def init_params(key, n_in, n_h, n_clusters=7):
    k1, k2, k3 = jax.random.split(key, 3)
    lim_w = (6.0 / (n_in + n_h)) ** 0.5                      # GCN linear: xavier uniform
    w = jax.random.uniform(k1, (n_in, n_h), jnp.float32, -lim_w, lim_w)
    b = jnp.zeros((1, n_h), jnp.float32)
    alpha = jnp.asarray(0.25, jnp.float32)                   # PReLU default slope
    lim_d = (6.0 / (n_h + n_h)) ** 0.5                       # bilinear: xavier uniform
    w_disc = jax.random.uniform(k2, (n_h, n_h), jnp.float32, -lim_d, lim_d)
    b_disc = jnp.asarray(0.0, jnp.float32)
    std_c = (2.0 / (n_clusters + n_h)) ** 0.5                # cluster_layer: xavier normal
    cluster = std_c * jax.random.normal(k3, (n_clusters, n_h), jnp.float32)
    return {"w": w, "b": b, "alpha": alpha,
            "w_disc": w_disc, "b_disc": b_disc, "cluster": cluster}


def _reference(seq1, seq2, adj, params):
    """Pure-JAX reference mirroring the kernel's bf16 matmul precision."""
    s1 = jnp.squeeze(seq1, 0).astype(jnp.bfloat16)
    s2 = jnp.squeeze(seq2, 0).astype(jnp.bfloat16)
    adjb = adj.astype(jnp.bfloat16)
    w = params["w"].astype(jnp.bfloat16)
    xw1 = jnp.dot(s1, w, preferred_element_type=jnp.float32).astype(jnp.bfloat16)
    xw2 = jnp.dot(s2, w, preferred_element_type=jnp.float32).astype(jnp.bfloat16)

    def prop(xw):
        pre = jnp.dot(adjb, xw, preferred_element_type=jnp.float32) + params["b"]
        return jnp.where(pre > 0, pre, params["alpha"] * pre)

    h1, h2 = prop(xw1), prop(xw2)
    c = jax.nn.sigmoid(jnp.mean(h1, axis=0, keepdims=True))
    v = c @ params["w_disc"].T
    sc1 = h1 @ v.T + params["b_disc"]
    sc2 = h2 @ v.T + params["b_disc"]
    logits = jnp.concatenate([sc1, sc2], axis=0).reshape(1, -1)
    diff = h1[:, None, :] - params["cluster"][None, :, :]
    qn = 1.0 / (1.0 + jnp.sum(diff * diff, axis=2))
    q = qn / jnp.sum(qn, axis=1, keepdims=True)
    return h1, logits, q


if __name__ == "__main__":
    key = jax.random.PRNGKey(0)
    N, n_in, n_h = 64, 32, 32

    k_seq, k_perm, k_adj, k_par = jax.random.split(key, 4)
    seq1 = jax.random.normal(k_seq, (1, N, n_in), jnp.float32)
    perm = jax.random.permutation(k_perm, N)                 # row-shuffled negatives
    seq2 = seq1[:, perm, :]
    a = (jax.random.uniform(k_adj, (N, N)) < 0.1).astype(jnp.float32)
    a = jnp.maximum(a, a.T) + jnp.eye(N, dtype=jnp.float32)
    adj = a / jnp.sum(a, axis=1, keepdims=True)              # row-normalized dense adjacency

    params = init_params(k_par, n_in, n_h)

    ret, logits, q = dgi_forward(seq1, seq2, adj, params)
    jax.block_until_ready((ret, logits, q))

    assert ret.shape == (N, n_h)
    assert logits.shape == (1, 2 * N)
    assert q.shape == (N, 7)
    assert bool(jnp.all(jnp.isfinite(ret)))
    assert bool(jnp.all(jnp.isfinite(logits)))
    assert bool(jnp.all(jnp.isfinite(q)))
    assert bool(jnp.allclose(jnp.sum(q, axis=1), 1.0, atol=1e-5))   # q rows are a simplex

    ret_r, logits_r, q_r = _reference(seq1, seq2, adj, params)
    assert bool(jnp.allclose(ret, ret_r, rtol=5e-2, atol=5e-2))
    assert bool(jnp.allclose(logits, logits_r, rtol=5e-2, atol=5e-2))
    assert bool(jnp.allclose(q, q_r, rtol=5e-2, atol=5e-2))

    print("KERNEL_OK")
</pallas_src>

<mosaic_0001>
module attributes {stable_mosaic.version = 11 : i64} {
  func.func @_dgi_prop_kernel(%arg0: i32, %arg1: i32, %arg2: memref<64x64xbf16, #tpu.memory_space<vmem>>, %arg3: memref<2x64x32xbf16, #tpu.memory_space<vmem>>, %arg4: memref<1x32xf32, #tpu.memory_space<vmem>>, %arg5: memref<1xf32, #tpu.memory_space<smem>>, %arg6: memref<64x32xbf16, #tpu.memory_space<vmem>>, %arg7: memref<64x32xbf16, #tpu.memory_space<vmem>>, %arg8: memref<1x1x32xf32, #tpu.memory_space<vmem>>, %arg9: memref<2x64x32xf32, #tpu.memory_space<vmem>>) attributes {dimension_semantics = [#tpu.dimension_semantics<parallel>, #tpu.dimension_semantics<arbitrary>], iteration_bounds = array<i64: 1, 1>, scalar_prefetch = 0 : i64, scratch_operands = 1 : i64, tpu.core_type = #tpu.core_type<tc>, window_params = [{transform_indices = @transform_0, window_bounds = array<i64: 64, 64>}, {transform_indices = @transform_1, window_bounds = array<i64: 2, 64, 32>}, {pipeline_mode = #tpu.pipeline_mode<synchronous>, transform_indices = @transform_2, window_bounds = array<i64: 1, 32>}, {transform_indices = @transform_3, window_bounds = array<i64: 1>}, {transform_indices = @transform_4, window_bounds = array<i64: 64, 32>}, {transform_indices = @transform_5, window_bounds = array<i64: 64, 32>}, {transform_indices = @transform_6, window_bounds = array<i64: 1, 1, 32>}]} {
    %c0_i32 = arith.constant 0 : i32
    %0 = arith.cmpi eq, %arg1, %c0_i32 : i32
    %1 = arith.extui %0 : i1 to i32
    %c0_i32_0 = arith.constant 0 : i32
    %2 = arith.cmpi ne, %1, %c0_i32_0 : i32
    scf.if %2 {
      %cst_22 = arith.constant 0.000000e+00 : f32
      %25 = vector.broadcast %cst_22 : f32 to vector<2x64x32xf32>
      %c0_23 = arith.constant 0 : index
      %c0_24 = arith.constant 0 : index
      %c0_25 = arith.constant 0 : index
      %26 = vector.load %arg9[%c0_23, %c0_24, %c0_25] : memref<2x64x32xf32, #tpu.memory_space<vmem>>, vector<2x64x32xf32>
      tpu.vector_store %arg9[%c0_23, %c0_24, %c0_25], %25 {strides = array<i32>} : memref<2x64x32xf32, #tpu.memory_space<vmem>>, vector<2x64x32xf32>,
    } else {
    }
    %c0 = arith.constant 0 : index
    %c0_1 = arith.constant 0 : index
    %3 = vector.load %arg2[%c0, %c0_1] : memref<64x64xbf16, #tpu.memory_space<vmem>>, vector<64x64xbf16>
    %c0_2 = arith.constant 0 : index
    %c0_3 = arith.constant 0 : index
    %c0_4 = arith.constant 0 : index
    %4 = vector.load %arg9[%c0_2, %c0_3, %c0_4] : memref<2x64x32xf32, #tpu.memory_space<vmem>>, vector<1x64x32xf32>
    %5 = vector.shape_cast %4 : vector<1x64x32xf32> to vector<64x32xf32>
    %c0_5 = arith.constant 0 : index
    %c0_6 = arith.constant 0 : index
    %c0_7 = arith.constant 0 : index
    %6 = vector.load %arg3[%c0_5, %c0_6, %c0_7] : memref<2x64x32xbf16, #tpu.memory_space<vmem>>, vector<1x64x32xbf16>
    %7 = vector.shape_cast %6 : vector<1x64x32xbf16> to vector<64x32xbf16>
    %cst = arith.constant dense<0.000000e+00> : vector<64x32xf32>
    %8 = tpu.matmul %3, %7, %cst {dimension_numbers = #tpu.dot_dimension_numbers<[1], [0], [0], [1], [0, 0, 1, 1], [], []>} : vector<64x64xbf16>, vector<64x32xbf16>, vector<64x32xf32> -> vector<64x32xf32>
    %9 = arith.addf %5, %8 : vector<64x32xf32>
    %c0_8 = arith.constant 0 : index
    %c0_9 = arith.constant 0 : index
    %c0_10 = arith.constant 0 : index
    %10 = vector.load %arg9[%c0_8, %c0_9, %c0_10] : memref<2x64x32xf32, #tpu.memory_space<vmem>>, vector<1x64x32xf32>
    %11 = vector.shape_cast %10 : vector<1x64x32xf32> to vector<64x32xf32>
    %12 = vector.shape_cast %9 : vector<64x32xf32> to vector<1x64x32xf32>
    tpu.vector_store %arg9[%c0_8, %c0_9, %c0_10], %12 {strides = array<i32>} : memref<2x64x32xf32, #tpu.memory_space<vmem>>, vector<1x64x32xf32>,
    %c1 = arith.constant 1 : index
    %c0_11 = arith.constant 0 : index
    %c0_12 = arith.constant 0 : index
    %13 = vector.load %arg9[%c1, %c0_11, %c0_12] : memref<2x64x32xf32, #tpu.memory_space<vmem>>, vector<1x64x32xf32>
    %14 = vector.shape_cast %13 : vector<1x64x32xf32> to vector<64x32xf32>
    %c1_13 = arith.constant 1 : index
    %c0_14 = arith.constant 0 : index
    %c0_15 = arith.constant 0 : index
    %15 = vector.load %arg3[%c1_13, %c0_14, %c0_15] : memref<2x64x32xbf16, #tpu.memory_space<vmem>>, vector<1x64x32xbf16>
    %16 = vector.shape_cast %15 : vector<1x64x32xbf16> to vector<64x32xbf16>
    %cst_16 = arith.constant dense<0.000000e+00> : vector<64x32xf32>
    %17 = tpu.matmul %3, %16, %cst_16 {dimension_numbers = #tpu.dot_dimension_numbers<[1], [0], [0], [1], [0, 0, 1, 1], [], []>} : vector<64x64xbf16>, vector<64x32xbf16>, vector<64x32xf32> -> vector<64x32xf32>
    %18 = arith.addf %14, %17 : vector<64x32xf32>
    %c1_17 = arith.constant 1 : index
    %c0_18 = arith.constant 0 : index
    %c0_19 = arith.constant 0 : index
    %19 = vector.load %arg9[%c1_17, %c0_18, %c0_19] : memref<2x64x32xf32, #tpu.memory_space<vmem>>, vector<1x64x32xf32>
    %20 = vector.shape_cast %19 : vector<1x64x32xf32> to vector<64x32xf32>
    %21 = vector.shape_cast %18 : vector<64x32xf32> to vector<1x64x32xf32>
    tpu.vector_store %arg9[%c1_17, %c0_18, %c0_19], %21 {strides = array<i32>} : memref<2x64x32xf32, #tpu.memory_space<vmem>>, vector<1x64x32xf32>,
    %c0_i32_20 = arith.constant 0 : i32
    %22 = arith.cmpi eq, %arg1, %c0_i32_20 : i32
    %23 = arith.extui %22 : i1 to i32
    %c0_i32_21 = arith.constant 0 : i32
    %24 = arith.cmpi ne, %23, %c0_i32_21 : i32
    scf.if %24 {
      %c0_22 = arith.constant 0 : index
      %25 = memref.load %arg5[%c0_22] : memref<1xf32, #tpu.memory_space<smem>>
      %c0_23 = arith.constant 0 : index
      %c0_24 = arith.constant 0 : index
      %26 = vector.load %arg4[%c0_23, %c0_24] : memref<1x32xf32, #tpu.memory_space<vmem>>, vector<1x32xf32>
      %c0_25 = arith.constant 0 : index
      %c0_26 = arith.constant 0 : index
      %c0_27 = arith.constant 0 : index
      %27 = vector.load %arg9[%c0_25, %c0_26, %c0_27] : memref<2x64x32xf32, #tpu.memory_space<vmem>>, vector<1x64x32xf32>
      %28 = vector.shape_cast %27 : vector<1x64x32xf32> to vector<64x32xf32>
      %29 = vector.broadcast %26 : vector<1x32xf32> to vector<64x32xf32>
      %30 = arith.addf %28, %29 : vector<64x32xf32>
      %c1_28 = arith.constant 1 : index
      %c0_29 = arith.constant 0 : index
      %c0_30 = arith.constant 0 : index
      %31 = vector.load %arg9[%c1_28, %c0_29, %c0_30] : memref<2x64x32xf32, #tpu.memory_space<vmem>>, vector<1x64x32xf32>
      %32 = vector.shape_cast %31 : vector<1x64x32xf32> to vector<64x32xf32>
      %33 = vector.broadcast %26 : vector<1x32xf32> to vector<64x32xf32>
      %34 = arith.addf %32, %33 : vector<64x32xf32>
      %cst_31 = arith.constant 0.000000e+00 : f32
      %35 = vector.broadcast %cst_31 : f32 to vector<64x32xf32>
      %36 = arith.cmpf ogt, %30, %35 : vector<64x32xf32>
      %37 = vector.broadcast %25 : f32 to vector<64x32xf32>
      %38 = arith.mulf %37, %30 : vector<64x32xf32>
      %39 = arith.select %36, %30, %38 : vector<64x32xi1>, vector<64x32xf32>
      %cst_32 = arith.constant 0.000000e+00 : f32
      %40 = vector.broadcast %cst_32 : f32 to vector<64x32xf32>
      %41 = arith.cmpf ogt, %34, %40 : vector<64x32xf32>
      %42 = vector.broadcast %25 : f32 to vector<64x32xf32>
      %43 = arith.mulf %42, %34 : vector<64x32xf32>
      %44 = arith.select %41, %34, %43 : vector<64x32xi1>, vector<64x32xf32>
      %45 = arith.truncf %39 : vector<64x32xf32> to vector<64x32xbf16>
      %c0_33 = arith.constant 0 : index
      %c0_34 = arith.constant 0 : index
      %46 = vector.load %arg6[%c0_33, %c0_34] : memref<64x32xbf16, #tpu.memory_space<vmem>>, vector<64x32xbf16>
      tpu.vector_store %arg6[%c0_33, %c0_34], %45 {strides = array<i32>} : memref<64x32xbf16, #tpu.memory_space<vmem>>, vector<64x32xbf16>,
      %47 = arith.truncf %44 : vector<64x32xf32> to vector<64x32xbf16>
      %c0_35 = arith.constant 0 : index
      %c0_36 = arith.constant 0 : index
      %48 = vector.load %arg7[%c0_35, %c0_36] : memref<64x32xbf16, #tpu.memory_space<vmem>>, vector<64x32xbf16>
      tpu.vector_store %arg7[%c0_35, %c0_36], %47 {strides = array<i32>} : memref<64x32xbf16, #tpu.memory_space<vmem>>, vector<64x32xbf16>,
      %cst_37 = arith.constant dense<0.000000e+00> : vector<32xf32>
      %49 = vector.multi_reduction <add>, %39, %cst_37 [0] : vector<64x32xf32> to vector<32xf32>
      %50 = vector.shape_cast %49 : vector<32xf32> to vector<1x32xf32>
      %51 = vector.shape_cast %50 : vector<1x32xf32> to vector<1x1x32xf32>
      %c0_38 = arith.constant 0 : index
      %c0_39 = arith.constant 0 : index
      %c0_40 = arith.constant 0 : index
      %52 = vector.load %arg8[%c0_38, %c0_39, %c0_40] : memref<1x1x32xf32, #tpu.memory_space<vmem>>, vector<1x1x32xf32>
      tpu.vector_store %arg8[%c0_38, %c0_39, %c0_40], %51 {strides = array<i32>} : memref<1x1x32xf32, #tpu.memory_space<vmem>>, vector<1x1x32xf32>,
    } else {
    }
    return
  }
  func.func @transform_0(%arg0: i32, %arg1: i32) -> (i32, i32) {
    %c0_i32 = arith.constant 0 : i32
    return %arg0, %arg1 : i32, i32
  }
  func.func @transform_1(%arg0: i32, %arg1: i32) -> (i32, i32, i32) {
    %c0_i32 = arith.constant 0 : i32
    %c0_i32_0 = arith.constant 0 : i32
    %c0_i32_1 = arith.constant 0 : i32
    return %c0_i32, %arg1, %c0_i32_0 : i32, i32, i32
  }
  func.func @transform_2(%arg0: i32, %arg1: i32) -> (i32, i32) {
    %c0_i32 = arith.constant 0 : i32
    %c0_i32_0 = arith.constant 0 : i32
    %c0_i32_1 = arith.constant 0 : i32
    return %c0_i32, %c0_i32_0 : i32, i32
  }
  func.func @transform_3(%arg0: i32, %arg1: i32) -> i32 {
    %c0_i32 = arith.constant 0 : i32
    %c0_i32_0 = arith.constant 0 : i32
    return %c0_i32 : i32
  }
  func.func @transform_4(%arg0: i32, %arg1: i32) -> (i32, i32) {
    %c0_i32 = arith.constant 0 : i32
    %c0_i32_0 = arith.constant 0 : i32
    return %arg0, %c0_i32 : i32, i32
  }
  func.func @transform_5(%arg0: i32, %arg1: i32) -> (i32, i32) {
    %c0_i32 = arith.constant 0 : i32
    %c0_i32_0 = arith.constant 0 : i32
    return %arg0, %c0_i32 : i32, i32
  }
  func.func @transform_6(%arg0: i32, %arg1: i32) -> (i32, i32, i32) {
    %c0_i32 = arith.constant 0 : i32
    %c0_i32_0 = arith.constant 0 : i32
    %c0_i32_1 = arith.constant 0 : i32
    return %arg0, %c0_i32, %c0_i32_0 : i32, i32, i32
  }
}

</mosaic_0001>

<llo_original>
// kernel: tpu_custom_call.1
$region0: #{tpu_custom_call.1}
  #allocation0 [shape = 'u32[]', space=smem, size = 0x4, offset = 0x4, fixed_abs, tag = 'smem constant byte address 0x4 - core index']
  #allocation1 [shape = 'u32[72,128]{1,0:T(1,128)}', space=vmem, size = 0x9000, scoped, tag = 'internal scratch']
  #allocation2 [shape = 'f32[2,64,32]{2,1,0:T(8,128)}', space=vmem, size = 0x10000, scoped, tag = 'scratch operand']
  #allocation3 [shape = 'f32[1]{0:T(128)S(6)}', space=smem, size = 0x200, scoped, tag = 'scoped memory for tpu_custom_call.1']
  %s0 = inlined_call_operand.vmem [shape: bf16[64,64], index: 0, kind: input, shape index: {}]
  %s1 = inlined_call_operand.vmem [shape: bf16[2,64,32], index: 1, kind: input, shape index: {}]
  %s2 = inlined_call_operand.vmem [shape: f32[1,32], index: 2, kind: input, shape index: {}]
  %s3 = inlined_call_operand.<no memory space> [shape: f32[1], index: 3, kind: input, shape index: {}]
  %s4 = inlined_call_operand.vmem [shape: bf16[64,32], index: 4, kind: output, shape index: {0}]
  %s5 = inlined_call_operand.vmem [shape: bf16[64,32], index: 5, kind: output, shape index: {1}]
  %s6 = inlined_call_operand.hbm [shape: f32[1,1,32], index: 6, kind: output, shape index: {2}]
  %7 = xla_tuple %s4, %s5, %s6
  %s8 = sld [smem:[#allocation0]]
  $region50: #{tpu_custom_call.1} parent=0
    _
  %s10 = ssub.s32 1, %s8
  %s11 = scalar_select 0, %s10, %s8
  %12 = sst [smem:[#allocation3]] %s3
  $region1: #{tpu_custom_call.1} parent=0
    #allocation4 [shape = 'u8[512]{0}', space=vmem, size = 0x400, scoped, tag = 'output window, operand 2, single buffered']
    #allocation5 [shape = 's32[1]{0}', space=sflag, size = 0x4, scoped, tag = 'scoped memory for tpu_custom_call.1']
    %13 = vsyncpa [#allocation5], 0
    // Predicated region
    $region2: #{tpu_custom_call.1} parent=1 // pred_check
      _
    $region3: #{tpu_custom_call.1} parent=1 // pred_check_branch
      %15 = sbr.rel (0) target = $region5
    $region4: #{tpu_custom_call.1} parent=1 // pred_region
      _
    $region5: #{tpu_custom_call.1} parent=1 // pred_fallthru
      _
    // Predicated region
    $region6: #{tpu_custom_call.1} parent=1 // pred_check
      _
    $region7: #{tpu_custom_call.1} parent=1 // pred_check_branch
      %17 = sbr.rel (0) target = $region9
    $region8: #{tpu_custom_call.1} parent=1 // pred_region
      _
    $region9: #{tpu_custom_call.1} parent=1 // pred_fallthru
      _
    // Predicated region
    $region10: #{tpu_custom_call.1} parent=1 // pred_check
      _
    $region11: #{tpu_custom_call.1} parent=1 // pred_check_branch
      %19 = sbr.rel (0) target = $region13
    $region12: #{tpu_custom_call.1} parent=1 // pred_region
      _
    $region13: #{tpu_custom_call.1} parent=1 // pred_fallthru
      _
    // Predicated region
    $region14: #{tpu_custom_call.1} parent=1 // pred_check
      _
    $region15: #{tpu_custom_call.1} parent=1 // pred_check_branch
      %21 = sbr.rel (0) target = $region17
    $region16: #{tpu_custom_call.1} parent=1 // pred_region
      _
    $region17: #{tpu_custom_call.1} parent=1 // pred_fallthru
      _
    %p23 = scmp.eq.s32.totalorder 0, 0
    // Predicated region
    $region18: #{tpu_custom_call.1} parent=1 // pred_check
      %p24 = pneg %p23
    $region19: #{tpu_custom_call.1} parent=1 // pred_check_branch
      %26 = sbr.rel (%p24) target = $region21
    $region20: #{tpu_custom_call.1} parent=1 // pred_region
      %vm27 = vcmask 261120
      %28 = vst.msk [vmem:[#allocation2] sm:$0xff] %vm27, 0.0
      %29 = vst.msk [vmem:[#allocation2 + $0x8] sm:$0xff] %vm27, 0.0
      %30 = vst.msk [vmem:[#allocation2 + $0x10] sm:$0xff] %vm27, 0.0
      %31 = vst.msk [vmem:[#allocation2 + $0x18] sm:$0xff] %vm27, 0.0
      %32 = vst.msk [vmem:[#allocation2 + $0x20] sm:$0xff] %vm27, 0.0
      %33 = vst.msk [vmem:[#allocation2 + $0x28] sm:$0xff] %vm27, 0.0
      %34 = vst.msk [vmem:[#allocation2 + $0x30] sm:$0xff] %vm27, 0.0
      %35 = vst.msk [vmem:[#allocation2 + $0x38] sm:$0xff] %vm27, 0.0
      %36 = vst.msk [vmem:[#allocation2 + $0x40] sm:$0xff] %vm27, 0.0
      %37 = vst.msk [vmem:[#allocation2 + $0x48] sm:$0xff] %vm27, 0.0
      %38 = vst.msk [vmem:[#allocation2 + $0x50] sm:$0xff] %vm27, 0.0
      %39 = vst.msk [vmem:[#allocation2 + $0x58] sm:$0xff] %vm27, 0.0
      %40 = vst.msk [vmem:[#allocation2 + $0x60] sm:$0xff] %vm27, 0.0
      %41 = vst.msk [vmem:[#allocation2 + $0x68] sm:$0xff] %vm27, 0.0
      %42 = vst.msk [vmem:[#allocation2 + $0x70] sm:$0xff] %vm27, 0.0
      %43 = vst.msk [vmem:[#allocation2 + $0x78] sm:$0xff] %vm27, 0.0
    $region21: #{tpu_custom_call.1} parent=1 // pred_fallthru
      _
    %v44 = vld [vmem:[%s0] sm:$0xf]
    %v45 = vld [vmem:[%s0 + $0x4] sm:$0xf]
    %v46 = vld [vmem:[%s0 + $0x8] sm:$0xf]
    %v47 = vld [vmem:[%s0 + $0xc] sm:$0xf]
    %v48 = vld [vmem:[%s0 + $0x10] sm:$0xf]
    %v49 = vld [vmem:[%s0 + $0x14] sm:$0xf]
    %v50 = vld [vmem:[%s0 + $0x18] sm:$0xf]
    %v51 = vld [vmem:[%s0 + $0x1c] sm:$0xf]
    %v52 = vld [vmem:[#allocation2] sm:$0xff]
    %v53 = vld [vmem:[#allocation2 + $0x8] sm:$0xff]
    %v54 = vld [vmem:[#allocation2 + $0x10] sm:$0xff]
    %v55 = vld [vmem:[#allocation2 + $0x18] sm:$0xff]
    %v56 = vld [vmem:[#allocation2 + $0x20] sm:$0xff]
    %v57 = vld [vmem:[#allocation2 + $0x28] sm:$0xff]
    %v58 = vld [vmem:[#allocation2 + $0x30] sm:$0xff]
    %v59 = vld [vmem:[#allocation2 + $0x38] sm:$0xff]
    %v60 = vld [vmem:[%s1] sm:$0xf]
    %v61 = vld [vmem:[%s1 + $0x4] sm:$0xf]
    %v62 = vld [vmem:[%s1 + $0x8] sm:$0xf]
    %v63 = vld [vmem:[%s1 + $0xc] sm:$0xf]
    %v64 = vld [vmem:[%s1 + $0x10] sm:$0xf]
    %v65 = vld [vmem:[%s1 + $0x14] sm:$0xf]
    %v66 = vld [vmem:[%s1 + $0x18] sm:$0xf]
    %v67 = vld [vmem:[%s1 + $0x1c] sm:$0xf]
    %v76 = vunpack.c.l.b16 %v44
    %v77 = vunpack.c.l.b16 %v45
    %v78 = vunpack.c.l.b16 %v46
    %v79 = vunpack.c.l.b16 %v47
    %v80 = vunpack.c.l.b16 %v48
    %v81 = vunpack.c.l.b16 %v49
    %v82 = vunpack.c.l.b16 %v50
    %v83 = vunpack.c.l.b16 %v51
    %v84 = vpack.c.b16 %v77, %v76
    %v85 = vpack.c.b16 %v79, %v78
    %v86 = vpack.c.b16 %v81, %v80
    %v87 = vpack.c.b16 %v83, %v82
    %v96 = vunpack.c.l.b16 %v60
    %v97 = vunpack.c.l.b16 %v61
    %v98 = vunpack.c.l.b16 %v62
    %v99 = vunpack.c.l.b16 %v63
    %v100 = vunpack.c.l.b16 %v64
    %v101 = vunpack.c.l.b16 %v65
    %v102 = vunpack.c.l.b16 %v66
    %v103 = vunpack.c.l.b16 %v67
    %v104 = vpack.c.b16 %v97, %v96
    %v105 = vpack.c.b16 %v99, %v98
    %v106 = vpack.c.b16 %v101, %v100
    %v107 = vpack.c.b16 %v103, %v102
    %vm112 = vcmask 523264
    %v114 = vsel %vm112, %v84, 0
    %v117 = vsel %vm112, %v85, 0
    %v120 = vsel %vm112, %v86, 0
    %v123 = vsel %vm112, %v87, 0
    %125 = vmatpush.bf16.msra.mxu0 0
    %126 = vmatpush.bf16.msra.mxu0 0
    %127 = vmatpush.bf16.msra.mxu0 0
    %128 = vmatpush.bf16.msra.mxu0 0
    %129 = vmatpush.bf16.msra.mxu0 %v107
    %130 = vmatpush.bf16.msra.mxu0 %v106
    %131 = vmatpush.bf16.msra.mxu0 %v105
    %132 = vmatpush.bf16.msra.mxu0 %v104
    %133 = vmatmul.bf16.gmra.mxu0 %v114
    %v134 = vpop.f32.mrf.mxu0
    %v135 = vadd.f32 0.0, %v134
    %v136 = vpop.f32.mrf.mxu0
    %v137 = vadd.f32 0.0, %v136
    %138 = vmatmul.bf16.gmra.mxu0 %v117
    %v139 = vpop.f32.mrf.mxu0
    %v140 = vadd.f32 0.0, %v139
    %v141 = vpop.f32.mrf.mxu0
    %v142 = vadd.f32 0.0, %v141
    %143 = vmatmul.bf16.gmra.mxu0 %v120
    %v144 = vpop.f32.mrf.mxu0
    %v145 = vadd.f32 0.0, %v144
    %v146 = vpop.f32.mrf.mxu0
    %v147 = vadd.f32 0.0, %v146
    %148 = vmatmul.bf16.gmra.mxu0 %v123
    %v149 = vpop.f32.mrf.mxu0
    %v150 = vadd.f32 0.0, %v149
    %v151 = vpop.f32.mrf.mxu0
    %v152 = vadd.f32 0.0, %v151
    %153 = vdwg.mxu0
    %v154 = vadd.f32 %v52, %v135
    %v155 = vadd.f32 %v53, %v137
    %v156 = vadd.f32 %v54, %v140
    %v157 = vadd.f32 %v55, %v142
    %v158 = vadd.f32 %v56, %v145
    %v159 = vadd.f32 %v57, %v147
    %v160 = vadd.f32 %v58, %v150
    %v161 = vadd.f32 %v59, %v152
    %vm162 = vcmask 261120
    %163 = vst.msk [vmem:[#allocation2] sm:$0xff] %vm162, %v154
    %164 = vst.msk [vmem:[#allocation2 + $0x8] sm:$0xff] %vm162, %v155
    %165 = vst.msk [vmem:[#allocation2 + $0x10] sm:$0xff] %vm162, %v156
    %166 = vst.msk [vmem:[#allocation2 + $0x18] sm:$0xff] %vm162, %v157
    %167 = vst.msk [vmem:[#allocation2 + $0x20] sm:$0xff] %vm162, %v158
    %168 = vst.msk [vmem:[#allocation2 + $0x28] sm:$0xff] %vm162, %v159
    %169 = vst.msk [vmem:[#allocation2 + $0x30] sm:$0xff] %vm162, %v160
    %170 = vst.msk [vmem:[#allocation2 + $0x38] sm:$0xff] %vm162, %v161
    %s171 = scalar_lea.vmem [#allocation2], 64
    %v172 = vld [vmem:[%s171] sm:$0xff]
    %v173 = vld [vmem:[%s171 + $0x8] sm:$0xff]
    %v174 = vld [vmem:[%s171 + $0x10] sm:$0xff]
    %v175 = vld [vmem:[%s171 + $0x18] sm:$0xff]
    %v176 = vld [vmem:[%s171 + $0x20] sm:$0xff]
    %v177 = vld [vmem:[%s171 + $0x28] sm:$0xff]
    %v178 = vld [vmem:[%s171 + $0x30] sm:$0xff]
    %v179 = vld [vmem:[%s171 + $0x38] sm:$0xff]
    %s180 = scalar_lea.vmem %s1, 32
    %v181 = vld [vmem:[%s180] sm:$0xf]
    %v182 = vld [vmem:[%s180 + $0x4] sm:$0xf]
    %v183 = vld [vmem:[%s180 + $0x8] sm:$0xf]
    %v184 = vld [vmem:[%s180 + $0xc] sm:$0xf]
    %v185 = vld [vmem:[%s180 + $0x10] sm:$0xf]
    %v186 = vld [vmem:[%s180 + $0x14] sm:$0xf]
    %v187 = vld [vmem:[%s180 + $0x18] sm:$0xf]
    %v188 = vld [vmem:[%s180 + $0x1c] sm:$0xf]
    %v197 = vunpack.c.l.b16 %v181
    %v198 = vunpack.c.l.b16 %v182
    %v199 = vunpack.c.l.b16 %v183
    %v200 = vunpack.c.l.b16 %v184
    %v201 = vunpack.c.l.b16 %v185
    %v202 = vunpack.c.l.b16 %v186
    %v203 = vunpack.c.l.b16 %v187
    %v204 = vunpack.c.l.b16 %v188
    %v205 = vpack.c.b16 %v198, %v197
    %v206 = vpack.c.b16 %v200, %v199
    %v207 = vpack.c.b16 %v202, %v201
    %v208 = vpack.c.b16 %v204, %v203
    %213 = vmatpush.bf16.msra.mxu0 0
    %214 = vmatpush.bf16.msra.mxu0 0
    %215 = vmatpush.bf16.msra.mxu0 0
    %216 = vmatpush.bf16.msra.mxu0 0
    %217 = vmatpush.bf16.msra.mxu0 %v208
    %218 = vmatpush.bf16.msra.mxu0 %v207
    %219 = vmatpush.bf16.msra.mxu0 %v206
    %220 = vmatpush.bf16.msra.mxu0 %v205
    %221 = vmatmul.bf16.gmra.mxu0 %v114
    %v222 = vpop.f32.mrf.mxu0
    %v223 = vadd.f32 0.0, %v222
    %v224 = vpop.f32.mrf.mxu0
    %v225 = vadd.f32 0.0, %v224
    %226 = vmatmul.bf16.gmra.mxu0 %v117
    %v227 = vpop.f32.mrf.mxu0
    %v228 = vadd.f32 0.0, %v227
    %v229 = vpop.f32.mrf.mxu0
    %v230 = vadd.f32 0.0, %v229
    %231 = vmatmul.bf16.gmra.mxu0 %v120
    %v232 = vpop.f32.mrf.mxu0
    %v233 = vadd.f32 0.0, %v232
    %v234 = vpop.f32.mrf.mxu0
    %v235 = vadd.f32 0.0, %v234
    %236 = vmatmul.bf16.gmra.mxu0 %v123
    %v237 = vpop.f32.mrf.mxu0
    %v238 = vadd.f32 0.0, %v237
    %v239 = vpop.f32.mrf.mxu0
    %v240 = vadd.f32 0.0, %v239
    %241 = vdwg.mxu0
    %v242 = vadd.f32 %v172, %v223
    %v243 = vadd.f32 %v173, %v225
    %v244 = vadd.f32 %v174, %v228
    %v245 = vadd.f32 %v175, %v230
    %v246 = vadd.f32 %v176, %v233
    %v247 = vadd.f32 %v177, %v235
    %v248 = vadd.f32 %v178, %v238
    %v249 = vadd.f32 %v179, %v240
    %250 = vst.msk [vmem:[%s171] sm:$0xff] %vm162, %v242
    %251 = vst.msk [vmem:[%s171 + $0x8] sm:$0xff] %vm162, %v243
    %252 = vst.msk [vmem:[%s171 + $0x10] sm:$0xff] %vm162, %v244
    %253 = vst.msk [vmem:[%s171 + $0x18] sm:$0xff] %vm162, %v245
    %254 = vst.msk [vmem:[%s171 + $0x20] sm:$0xff] %vm162, %v246
    %255 = vst.msk [vmem:[%s171 + $0x28] sm:$0xff] %vm162, %v247
    %256 = vst.msk [vmem:[%s171 + $0x30] sm:$0xff] %vm162, %v248
    %257 = vst.msk [vmem:[%s171 + $0x38] sm:$0xff] %vm162, %v249
    // Predicated region
    $region22: #{tpu_custom_call.1} parent=1 // pred_check
      %p258 = pneg %p23
    $region23: #{tpu_custom_call.1} parent=1 // pred_check_branch
      %260 = sbr.rel (%p258) target = $region25
    $region24: #{tpu_custom_call.1} parent=1 // pred_region
      %s261 = sld [smem:[#allocation3]]
      %v262 = vld [vmem:[%s2] sm:$0x1]
      %v263 = vld [vmem:[#allocation2] sm:$0xff]
      %v264 = vld [vmem:[#allocation2 + $0x8] sm:$0xff]
      %v265 = vld [vmem:[#allocation2 + $0x10] sm:$0xff]
      %v266 = vld [vmem:[#allocation2 + $0x18] sm:$0xff]
      %v267 = vld [vmem:[#allocation2 + $0x20] sm:$0xff]
      %v268 = vld [vmem:[#allocation2 + $0x28] sm:$0xff]
      %v269 = vld [vmem:[#allocation2 + $0x30] sm:$0xff]
      %v270 = vld [vmem:[#allocation2 + $0x38] sm:$0xff]
      %v272 = vperm.slane %v262, 0
      %v274 = vadd.f32 %v263, %v272
      %v275 = vadd.f32 %v264, %v272
      %v276 = vadd.f32 %v265, %v272
      %v277 = vadd.f32 %v266, %v272
      %v278 = vadd.f32 %v267, %v272
      %v279 = vadd.f32 %v268, %v272
      %v280 = vadd.f32 %v269, %v272
      %v281 = vadd.f32 %v270, %v272
      %v282 = vld [vmem:[%s171] sm:$0xff]
      %v283 = vld [vmem:[%s171 + $0x8] sm:$0xff]
      %v284 = vld [vmem:[%s171 + $0x10] sm:$0xff]
      %v285 = vld [vmem:[%s171 + $0x18] sm:$0xff]
      %v286 = vld [vmem:[%s171 + $0x20] sm:$0xff]
      %v287 = vld [vmem:[%s171 + $0x28] sm:$0xff]
      %v288 = vld [vmem:[%s171 + $0x30] sm:$0xff]
      %v289 = vld [vmem:[%s171 + $0x38] sm:$0xff]
      %v290 = vadd.f32 %v282, %v272
      %v291 = vadd.f32 %v283, %v272
      %v292 = vadd.f32 %v284, %v272
      %v293 = vadd.f32 %v285, %v272
      %v294 = vadd.f32 %v286, %v272
      %v295 = vadd.f32 %v287, %v272
      %v296 = vadd.f32 %v288, %v272
      %v297 = vadd.f32 %v289, %v272
      %vm298 = vcmp.gt.f32.partialorder %v274, 0.0
      %vm299 = vcmp.gt.f32.partialorder %v275, 0.0
      %vm300 = vcmp.gt.f32.partialorder %v276, 0.0
      %vm301 = vcmp.gt.f32.partialorder %v277, 0.0
      %vm302 = vcmp.gt.f32.partialorder %v278, 0.0
      %vm303 = vcmp.gt.f32.partialorder %v279, 0.0
      %vm304 = vcmp.gt.f32.partialorder %v280, 0.0
      %vm305 = vcmp.gt.f32.partialorder %v281, 0.0
      %v306 = vstv %s261
      %v307 = vmul.f32 %v306, %v274
      %v308 = vmul.f32 %v306, %v275
      %v309 = vmul.f32 %v306, %v276
      %v310 = vmul.f32 %v306, %v277
      %v311 = vmul.f32 %v306, %v278
      %v312 = vmul.f32 %v306, %v279
      %v313 = vmul.f32 %v306, %v280
      %v314 = vmul.f32 %v306, %v281
      %v315 = vsel %vm298, %v274, %v307
      %v316 = vsel %vm299, %v275, %v308
      %v317 = vsel %vm300, %v276, %v309
      %v318 = vsel %vm301, %v277, %v310
      %v319 = vsel %vm302, %v278, %v311
      %v320 = vsel %vm303, %v279, %v312
      %v321 = vsel %vm304, %v280, %v313
      %v322 = vsel %vm305, %v281, %v314
      %vm323 = vcmp.gt.f32.partialorder %v290, 0.0
      %vm324 = vcmp.gt.f32.partialorder %v291, 0.0
      %vm325 = vcmp.gt.f32.partialorder %v292, 0.0
      %vm326 = vcmp.gt.f32.partialorder %v293, 0.0
      %vm327 = vcmp.gt.f32.partialorder %v294, 0.0
      %vm328 = vcmp.gt.f32.partialorder %v295, 0.0
      %vm329 = vcmp.gt.f32.partialorder %v296, 0.0
      %vm330 = vcmp.gt.f32.partialorder %v297, 0.0
      %v331 = vmul.f32 %v306, %v290
      %v332 = vmul.f32 %v306, %v291
      %v333 = vmul.f32 %v306, %v292
      %v334 = vmul.f32 %v306, %v293
      %v335 = vmul.f32 %v306, %v294
      %v336 = vmul.f32 %v306, %v295
      %v337 = vmul.f32 %v306, %v296
      %v338 = vmul.f32 %v306, %v297
      %v339 = vsel %vm323, %v290, %v331
      %v340 = vsel %vm324, %v291, %v332
      %v341 = vsel %vm325, %v292, %v333
      %v342 = vsel %vm326, %v293, %v334
      %v343 = vsel %vm327, %v294, %v335
      %v344 = vsel %vm328, %v295, %v336
      %v345 = vsel %vm329, %v296, %v337
      %v346 = vsel %vm330, %v297, %v338
      %v347 = vpack.c.bf16 %v315, %v315
      %v348 = vpack.c.bf16 %v316, %v316
      %v349 = vpack.c.bf16 %v317, %v317
      %v350 = vpack.c.bf16 %v318, %v318
      %v351 = vpack.c.bf16 %v319, %v319
      %v352 = vpack.c.bf16 %v320, %v320
      %v353 = vpack.c.bf16 %v321, %v321
      %v354 = vpack.c.bf16 %v322, %v322
      %vm355 = vcmask 257024
      %356 = vst.msk [vmem:[%s4] sm:$0xf] %vm355, %v347
      %357 = vst.msk [vmem:[%s4 + $0x4] sm:$0xf] %vm355, %v348
      %358 = vst.msk [vmem:[%s4 + $0x8] sm:$0xf] %vm355, %v349
      %359 = vst.msk [vmem:[%s4 + $0xc] sm:$0xf] %vm355, %v350
      %360 = vst.msk [vmem:[%s4 + $0x10] sm:$0xf] %vm355, %v351
      %361 = vst.msk [vmem:[%s4 + $0x14] sm:$0xf] %vm355, %v352
      %362 = vst.msk [vmem:[%s4 + $0x18] sm:$0xf] %vm355, %v353
      %363 = vst.msk [vmem:[%s4 + $0x1c] sm:$0xf] %vm355, %v354
      %v364 = vpack.c.bf16 %v339, %v339
      %v365 = vpack.c.bf16 %v340, %v340
      %v366 = vpack.c.bf16 %v341, %v341
      %v367 = vpack.c.bf16 %v342, %v342
      %v368 = vpack.c.bf16 %v343, %v343
      %v369 = vpack.c.bf16 %v344, %v344
      %v370 = vpack.c.bf16 %v345, %v345
      %v371 = vpack.c.bf16 %v346, %v346
      %372 = vst.msk [vmem:[%s5] sm:$0xf] %vm355, %v364
      %373 = vst.msk [vmem:[%s5 + $0x4] sm:$0xf] %vm355, %v365
      %374 = vst.msk [vmem:[%s5 + $0x8] sm:$0xf] %vm355, %v366
      %375 = vst.msk [vmem:[%s5 + $0xc] sm:$0xf] %vm355, %v367
      %376 = vst.msk [vmem:[%s5 + $0x10] sm:$0xf] %vm355, %v368
      %377 = vst.msk [vmem:[%s5 + $0x14] sm:$0xf] %vm355, %v369
      %378 = vst.msk [vmem:[%s5 + $0x18] sm:$0xf] %vm355, %v370
      %379 = vst.msk [vmem:[%s5 + $0x1c] sm:$0xf] %vm355, %v371
      %v380 = vsel %vm162, %v315, 0.0
      %v381 = vsel %vm162, %v316, 0.0
      %v382 = vadd.f32 %v380, %v381
      %v383 = vsel %vm162, %v317, 0.0
      %v384 = vadd.f32 %v382, %v383
      %v385 = vsel %vm162, %v318, 0.0
      %v386 = vadd.f32 %v384, %v385
      %v387 = vsel %vm162, %v319, 0.0
      %v388 = vadd.f32 %v386, %v387
      %v389 = vsel %vm162, %v320, 0.0
      %v390 = vadd.f32 %v388, %v389
      %v391 = vsel %vm162, %v321, 0.0
      %v392 = vadd.f32 %v390, %v391
      %v393 = vsel %vm162, %v322, 0.0
      %v394 = vadd.f32 %v392, %v393
      %v395 = vrot.slane %v394, 4
      %v396 = vadd.f32 %v394, %v395
      %v397 = vrot.slane %v396, 2
      %v398 = vadd.f32 %v396, %v397
      %v399 = vrot.slane %v398, 1
      %v400 = vadd.f32 %v398, %v399
      %vm401 = vcmask 253952
      %402 = vst.msk [vmem:[#allocation4] sm:$0x1] %vm401, %v400
    $region25: #{tpu_custom_call.1} parent=1 // pred_fallthru
      _
    // Predicated region
    $region26: #{tpu_custom_call.1} parent=1 // pred_check
      _
    $region27: #{tpu_custom_call.1} parent=1 // pred_check_branch
      %404 = sbr.rel (0) target = $region29
    $region28: #{tpu_custom_call.1} parent=1 // pred_region
      _
    $region29: #{tpu_custom_call.1} parent=1 // pred_fallthru
      _
    // Predicated region
    $region30: #{tpu_custom_call.1} parent=1 // pred_check
      _
    $region31: #{tpu_custom_call.1} parent=1 // pred_check_branch
      %406 = sbr.rel (0) target = $region33
    $region32: #{tpu_custom_call.1} parent=1 // pred_region
      _
    $region33: #{tpu_custom_call.1} parent=1 // pred_fallthru
      _
    // Predicated region
    $region34: #{tpu_custom_call.1} parent=1 // pred_check
      _
    $region35: #{tpu_custom_call.1} parent=1 // pred_check_branch
      %408 = sbr.rel (0) target = $region37
    $region36: #{tpu_custom_call.1} parent=1 // pred_region
      %410 = vsyncadd [#allocation5], 0
      %s412 = sshll.u32 [#allocation4], 4
      %s413 = int_to_ptr.vmem [resolvable:$true] %s412
      %s414 = sshll.u32 %s6, 4
      %s415 = int_to_ptr.hbm [resolvable:$true] %s414
      %417 = dma.vmem_to_hbm [thread:$0]  %s413, 16, %s415, [#allocation5]
    $region37: #{tpu_custom_call.1} parent=1 // pred_fallthru
      _
    // Predicated region
    $region38: #{tpu_custom_call.1} parent=1 // pred_check
      _
    $region39: #{tpu_custom_call.1} parent=1 // pred_check_branch
      %419 = sbr.rel (0) target = $region41
    $region40: #{tpu_custom_call.1} parent=1 // pred_region
      _
    $region41: #{tpu_custom_call.1} parent=1 // pred_fallthru
      _
    // Predicated region
    $region42: #{tpu_custom_call.1} parent=1 // pred_check
      _
    $region43: #{tpu_custom_call.1} parent=1 // pred_check_branch
      %421 = sbr.rel (0) target = $region45
    $region44: #{tpu_custom_call.1} parent=1 // pred_region
      _
    $region45: #{tpu_custom_call.1} parent=1 // pred_fallthru
      _
    // Predicated region
    $region46: #{tpu_custom_call.1} parent=1 // pred_check
      _
    $region47: #{tpu_custom_call.1} parent=1 // pred_check_branch
      %423 = sbr.rel (0) target = $region49
    $region48: #{tpu_custom_call.1} parent=1 // pred_region
      %425 = dma.done [#allocation5], 16
    $region49: #{tpu_custom_call.1} parent=1 // pred_fallthru
      _
    %426 = vsyncpa [#allocation5], 1

</llo_original>
